<compile_context>
chip_gen: v7x
topology: tpu7x:2x2x1
jax: 0.10.0
libtpu: 0.0.40
codegen_flags: <defaults>
</compile_context>

<pallas_src>
import jax
import jax.numpy as jnp
from jax.experimental import pallas as pl
from jax.experimental.pallas import tpu as pltpu

LANES = 128
SUBLANES = 8


def _round_up(x, m):
    return ((x + m - 1) // m) * m


def _chip_defaults():
    """Per-generation (block_rows, nsplit) tuned for HBM-roofline streaming."""
    try:
        kind = jax.devices()[0].device_kind.lower()
    except Exception:
        kind = ""
    if "v7" in kind:
        # 8192x128 f32 = 4 MiB/input; 2 inputs x 2 buffers = 16 MiB (< 32 MiB
        # scoped VMEM). Two TensorCores -> split the row stream in half.
        return 8192, 2
    if "v6" in kind:
        return 4096, 1          # 2 MiB/input, 8 MiB double-buffered.
    # v5e (16 MiB scoped VMEM) and unknown chips: conservative but large.
    return 4096, 1


def _make_mse_kernel(rows, br, acc_rows, nblocks, base_blk, bound,
                     tail_partial, overlap):
    """Streaming sum-of-squared-diff kernel.

    rows:         valid row count of the (rows, 128) slab
    br:           rows per streamed block
    acc_rows:     sublane height of the resident partial-sum slab (8 or 64)
    nblocks:      total number of row-blocks
    base_blk:     first block index owned by split 1 (0 when nsplit == 1)
    bound:        ownership boundary: split 0 owns [0, bound), split 1 [bound, rows)
    tail_partial: last block extends past `rows` (needs masking)
    overlap:      splits 0 and 1 both visit block `base_blk` (needs ownership mask)
    """
    needs_mask = tail_partial or overlap

    def kernel(p_ref, t_ref, o_ref):
        c = pl.program_id(0)          # core-split index       ("parallel")
        i = pl.program_id(1)          # streaming / reduction  ("arbitrary")

        @pl.when(i == 0)
        def _init():
            o_ref[...] = jnp.zeros_like(o_ref)

        diff = p_ref[...].astype(jnp.float32) - t_ref[...].astype(jnp.float32)
        sq = diff * diff

        def accumulate(x):
            # Leading-axis partial reduction only (pure VPU, no cross-lane XLU
            # work). acc_rows=64 -> 8 independent vreg accumulation chains.
            o_ref[...] += jnp.sum(x.reshape(-1, acc_rows, LANES), axis=0)

        if not needs_mask:
            accumulate(sq)
        else:
            blk = c * base_blk + i
            is_edge = jnp.bool_(False)
            if tail_partial:
                is_edge = jnp.logical_or(is_edge, blk == nblocks - 1)
            if overlap:
                is_edge = jnp.logical_or(is_edge, blk == base_blk)

            @pl.when(jnp.logical_not(is_edge))
            def _interior():                      # fast path: no mask work
                accumulate(sq)

            @pl.when(is_edge)
            def _edge():                          # tail / overlap blocks only
                row0 = blk * br
                row_ids = jax.lax.broadcasted_iota(jnp.int32, sq.shape, 0) + row0
                lo = c * bound
                hi = jnp.where(c == 0, bound, rows)
                accumulate(jnp.where((row_ids >= lo) & (row_ids < hi), sq, 0.0))

    return kernel


def mse_loss(pred, target, *, block_rows=None, nsplit=None,
             min_kernel_elems=1 << 18):
    """Mean squared error over all elements (PyTorch nn.MSELoss(), mean)."""
    assert pred.shape == target.shape, "pred/target must have identical shapes"
    n_elems = pred.size
    out_dtype = jnp.result_type(pred.dtype, target.dtype)

    # Small-input fast path: kernel launch + pipeline fixed overhead dominates
    # tiny inputs; plain XLA is strictly faster there on every generation.
    if n_elems < min_kernel_elems:
        d = pred.astype(jnp.float32) - target.astype(jnp.float32)
        return jnp.mean(d * d).astype(out_dtype)

    def_block_rows, def_nsplit = _chip_defaults()
    if block_rows is None:
        block_rows = def_block_rows
    if nsplit is None:
        nsplit = def_nsplit

    p = pred.reshape(-1)
    t = target.reshape(-1)

    rem = n_elems % LANES
    if rem:
        # TODO(synk): the (rare) lane pad copies both arrays in HBM; compute
        # the <=127-element tail in plain JAX instead if this path is ever hot.
        pad = LANES - rem
        p = jnp.pad(p, (0, pad))   # zero pad -> diff == 0 -> contributes nothing
        t = jnp.pad(t, (0, pad))

    rows = p.size // LANES
    p2 = p.reshape(rows, LANES)
    t2 = t.reshape(rows, LANES)

    # Sublane rounding unit: 8 for f32, 16 for bf16/fp16, 32 for 8-bit dtypes,
    # so the block matches the packed native tile.
    itemsize = int(min(p2.dtype.itemsize, t2.dtype.itemsize))
    unit = SUBLANES * max(1, 4 // max(1, itemsize))

    br = min(block_rows, _round_up(rows, unit))
    br = max(unit, (br // unit) * unit)

    nblocks = pl.cdiv(rows, br)
    if nblocks < 4:                 # too few blocks to split usefully
        nsplit = 1

    ksteps = pl.cdiv(nblocks, nsplit)     # streaming steps per split
    base_blk = nblocks - ksteps           # split 1 starts here (never fully OOB)
    bound = min(ksteps * br, rows)        # split 0 owns [0, bound)
    tail_partial = (rows % br) != 0
    overlap = (nsplit == 2) and (base_blk < ksteps)   # odd nblocks

    # 8 independent accumulation vregs (breaks the long dependent vadd chain)
    # whenever the block height allows it.
    acc_rows = 64 if br % 64 == 0 else SUBLANES

    kernel = _make_mse_kernel(rows, br, acc_rows, nblocks, base_blk, bound,
                              tail_partial, overlap)
    in_map = lambda c, i: (c * base_blk + i, 0)

    partials = pl.pallas_call(
        kernel,
        out_shape=jax.ShapeDtypeStruct((nsplit * acc_rows, LANES), jnp.float32),
        grid=(nsplit, ksteps),
        in_specs=[
            pl.BlockSpec((br, LANES), in_map),
            pl.BlockSpec((br, LANES), in_map),
        ],
        out_specs=pl.BlockSpec((acc_rows, LANES), lambda c, i: (c, 0)),
        compiler_params=pltpu.CompilerParams(
            dimension_semantics=("parallel", "arbitrary"),
        ),
    )(p2, t2)

    inv_n = 1.0 / float(n_elems)
    return (jnp.sum(partials, dtype=jnp.float32) * inv_n).astype(out_dtype)


if __name__ == "__main__":
    key = jax.random.PRNGKey(0)
    k1, k2, k3, k4 = jax.random.split(key, 4)

    # Small NCHW shapes consistent with DF(pred, target).
    pred = jax.random.normal(k1, (2, 4, 16, 16), dtype=jnp.float32)
    target = jax.random.normal(k2, (2, 4, 16, 16), dtype=jnp.float32)
    ref = jnp.mean((pred - target) ** 2)

    # 1) Public API (small input -> XLA fast path).
    loss = jax.block_until_ready(mse_loss(pred, target))
    assert jnp.allclose(loss, ref, rtol=1e-5, atol=1e-6), (loss, ref)

    # 2) Force the Pallas kernel path on the same small input.
    loss_k = jax.block_until_ready(mse_loss(pred, target, min_kernel_elems=0))
    assert jnp.allclose(loss_k, ref, rtol=1e-5, atol=1e-6), (loss_k, ref)

    # 3) Ragged shape: exercises lane padding + gated tail masking.
    pr = jax.random.normal(k3, (3, 5, 17, 19), dtype=jnp.float32)
    tr = jax.random.normal(k4, (3, 5, 17, 19), dtype=jnp.float32)
    loss_r = jax.block_until_ready(
        mse_loss(pr, tr, block_rows=64, min_kernel_elems=0))
    ref_r = jnp.mean((pr - tr) ** 2)
    assert jnp.allclose(loss_r, ref_r, rtol=1e-5, atol=1e-6), (loss_r, ref_r)

    # 4) Multi-block + 2-way split path (the configuration v7x would use),
    #    with a small block size so the grid has several streaming steps.
    pm = jax.random.normal(k1, (4, 8, 32, 32), dtype=jnp.float32)
    tm = jax.random.normal(k2, (4, 8, 32, 32), dtype=jnp.float32)
    loss_m = jax.block_until_ready(
        mse_loss(pm, tm, block_rows=64, nsplit=2, min_kernel_elems=0))
    ref_m = jnp.mean((pm - tm) ** 2)
    assert jnp.allclose(loss_m, ref_m, rtol=1e-5, atol=1e-6), (loss_m, ref_m)

    print("KERNEL_OK")
</pallas_src>

<mosaic_0001>
module attributes {stable_mosaic.version = 11 : i64} {
  func.func @kernel(%arg0: i32, %arg1: i32, %arg2: memref<16x128xf32, #tpu.memory_space<vmem>>, %arg3: memref<16x128xf32, #tpu.memory_space<vmem>>, %arg4: memref<8x128xf32, #tpu.memory_space<vmem>>) attributes {dimension_semantics = [#tpu.dimension_semantics<parallel>, #tpu.dimension_semantics<arbitrary>], iteration_bounds = array<i64: 1, 1>, scalar_prefetch = 0 : i64, scratch_operands = 0 : i64, tpu.core_type = #tpu.core_type<tc>, window_params = [{transform_indices = @transform_0, window_bounds = array<i64: 16, 128>}, {transform_indices = @transform_1, window_bounds = array<i64: 16, 128>}, {transform_indices = @transform_2, window_bounds = array<i64: 8, 128>}]} {
    %c0_i32 = arith.constant 0 : i32
    %0 = arith.cmpi eq, %arg1, %c0_i32 : i32
    %1 = arith.extui %0 : i1 to i32
    %c0_i32_0 = arith.constant 0 : i32
    %2 = arith.cmpi ne, %1, %c0_i32_0 : i32
    scf.if %2 {
      %cst_8 = arith.constant 0.000000e+00 : f32
      %12 = vector.broadcast %cst_8 : f32 to vector<8x128xf32>
      %c0_9 = arith.constant 0 : index
      %c0_10 = arith.constant 0 : index
      %13 = vector.load %arg4[%c0_9, %c0_10] : memref<8x128xf32, #tpu.memory_space<vmem>>, vector<8x128xf32>
      tpu.vector_store %arg4[%c0_9, %c0_10], %12 {strides = array<i32>} : memref<8x128xf32, #tpu.memory_space<vmem>>, vector<8x128xf32>,
    } else {
    }
    %c0 = arith.constant 0 : index
    %c0_1 = arith.constant 0 : index
    %3 = vector.load %arg2[%c0, %c0_1] : memref<16x128xf32, #tpu.memory_space<vmem>>, vector<16x128xf32>
    %c0_2 = arith.constant 0 : index
    %c0_3 = arith.constant 0 : index
    %4 = vector.load %arg3[%c0_2, %c0_3] : memref<16x128xf32, #tpu.memory_space<vmem>>, vector<16x128xf32>
    %5 = arith.subf %3, %4 : vector<16x128xf32>
    %6 = arith.mulf %5, %5 : vector<16x128xf32>
    %c0_4 = arith.constant 0 : index
    %c0_5 = arith.constant 0 : index
    %7 = vector.load %arg4[%c0_4, %c0_5] : memref<8x128xf32, #tpu.memory_space<vmem>>, vector<8x128xf32>
    %8 = vector.shape_cast %6 : vector<16x128xf32> to vector<2x8x128xf32>
    %cst = arith.constant dense<0.000000e+00> : vector<8x128xf32>
    %9 = vector.multi_reduction <add>, %8, %cst [0] : vector<2x8x128xf32> to vector<8x128xf32>
    %10 = arith.addf %7, %9 : vector<8x128xf32>
    %c0_6 = arith.constant 0 : index
    %c0_7 = arith.constant 0 : index
    %11 = vector.load %arg4[%c0_6, %c0_7] : memref<8x128xf32, #tpu.memory_space<vmem>>, vector<8x128xf32>
    tpu.vector_store %arg4[%c0_6, %c0_7], %10 {strides = array<i32>} : memref<8x128xf32, #tpu.memory_space<vmem>>, vector<8x128xf32>,
    return
  }
  func.func @transform_0(%arg0: i32, %arg1: i32) -> (i32, i32) {
    %c0_i32 = arith.constant 0 : i32
    %0 = arith.muli %arg0, %c0_i32 : i32
    %1 = arith.addi %0, %arg1 : i32
    %c0_i32_0 = arith.constant 0 : i32
    %c0_i32_1 = arith.constant 0 : i32
    return %1, %c0_i32_0 : i32, i32
  }
  func.func @transform_1(%arg0: i32, %arg1: i32) -> (i32, i32) {
    %c0_i32 = arith.constant 0 : i32
    %0 = arith.muli %arg0, %c0_i32 : i32
    %1 = arith.addi %0, %arg1 : i32
    %c0_i32_0 = arith.constant 0 : i32
    %c0_i32_1 = arith.constant 0 : i32
    return %1, %c0_i32_0 : i32, i32
  }
  func.func @transform_2(%arg0: i32, %arg1: i32) -> (i32, i32) {
    %c0_i32 = arith.constant 0 : i32
    %c0_i32_0 = arith.constant 0 : i32
    return %arg0, %c0_i32 : i32, i32
  }
}

</mosaic_0001>

<llo_original>
// kernel: tpu_custom_call.1
$region0: #{tpu_custom_call.1}
  #allocation0 [shape = 'u32[]', space=smem, size = 0x4, offset = 0x4, fixed_abs, tag = 'smem constant byte address 0x4 - core index']
  #allocation1 [shape = 'u32[144,128]{1,0:T(1,128)}', space=vmem, size = 0x12000, scoped, tag = 'internal scratch']
  %s0 = inlined_call_operand.hbm [shape: f32[16,128], index: 0, kind: input, shape index: {}]
  %s1 = inlined_call_operand.hbm [shape: f32[16,128], index: 1, kind: input, shape index: {}]
  %s2 = inlined_call_operand.hbm [shape: f32[8,128], index: 2, kind: output, shape index: {}]
  %s3 = sld [smem:[#allocation0]]
  $region30: #{tpu_custom_call.1} parent=0
    _
  %s5 = ssub.s32 1, %s3
  %s6 = scalar_select 0, %s5, %s3
  $region1: #{tpu_custom_call.1} parent=0
    #allocation2 [shape = 'u8[8192]{0}', space=vmem, size = 0x2000, scoped, tag = 'input window, operand 0, single buffered']
    #allocation3 [shape = 's32[1]{0}', space=sflag, size = 0x4, scoped, tag = 'scoped memory for tpu_custom_call.1']
    #allocation4 [shape = 's32[1]{0}', space=sflag, size = 0x4, scoped, tag = 'scoped memory for tpu_custom_call.1']
    #allocation5 [shape = 'u8[8192]{0}', space=vmem, size = 0x2000, scoped, tag = 'input window, operand 1, single buffered']
    #allocation6 [shape = 's32[1]{0}', space=sflag, size = 0x4, scoped, tag = 'scoped memory for tpu_custom_call.1']
    #allocation7 [shape = 'u8[4096]{0}', space=vmem, size = 0x1000, scoped, tag = 'output window, operand 0, single buffered']
    %7 = vsyncpa [#allocation3], 0
    %8 = vsyncpa [#allocation6], 0
    %9 = vsyncpa [#allocation4], 0
    // Predicated region
    $region2: #{tpu_custom_call.1} parent=1 // pred_check
      _
    $region3: #{tpu_custom_call.1} parent=1 // pred_check_branch
      %11 = sbr.rel (0) target = $region5
    $region4: #{tpu_custom_call.1} parent=1 // pred_region
      %s13 = ssub.s32 256, 256
      %14 = vsyncadd [#allocation3], %s13
      %s15 = sshll.u32 [#allocation2], 4
      %s16 = int_to_ptr.vmem [resolvable:$true] %s15
      %21 = dma.hbm_to_vmem [thread:$0]  %s0, 256, %s16, [#allocation3], 128, 128, 8
    $region5: #{tpu_custom_call.1} parent=1 // pred_fallthru
      _
    // Predicated region
    $region6: #{tpu_custom_call.1} parent=1 // pred_check
      _
    $region7: #{tpu_custom_call.1} parent=1 // pred_check_branch
      %23 = sbr.rel (0) target = $region9
    $region8: #{tpu_custom_call.1} parent=1 // pred_region
      %s25 = ssub.s32 256, 256
      %26 = vsyncadd [#allocation6], %s25
      %s27 = sshll.u32 [#allocation5], 4
      %s28 = int_to_ptr.vmem [resolvable:$true] %s27
      %33 = dma.hbm_to_vmem [thread:$0]  %s1, 256, %s28, [#allocation6], 128, 128, 8
    $region9: #{tpu_custom_call.1} parent=1 // pred_fallthru
      _
    // Predicated region
    $region10: #{tpu_custom_call.1} parent=1 // pred_check
      _
    $region11: #{tpu_custom_call.1} parent=1 // pred_check_branch
      %35 = sbr.rel (0) target = $region13
    $region12: #{tpu_custom_call.1} parent=1 // pred_region
      %36 = dma.done [#allocation3], 256
    $region13: #{tpu_custom_call.1} parent=1 // pred_fallthru
      _
    // Predicated region
    $region14: #{tpu_custom_call.1} parent=1 // pred_check
      _
    $region15: #{tpu_custom_call.1} parent=1 // pred_check_branch
      %38 = sbr.rel (0) target = $region17
    $region16: #{tpu_custom_call.1} parent=1 // pred_region
      %39 = dma.done [#allocation6], 256
    $region17: #{tpu_custom_call.1} parent=1 // pred_fallthru
      _
    %p40 = scmp.eq.s32.totalorder 0, 0
    // Predicated region
    $region18: #{tpu_custom_call.1} parent=1 // pred_check
      %p41 = pneg %p40
    $region19: #{tpu_custom_call.1} parent=1 // pred_check_branch
      %43 = sbr.rel (%p41) target = $region21
    $region20: #{tpu_custom_call.1} parent=1 // pred_region
      %44 = vst [vmem:[#allocation7] sm:$0xff] 0.0
    $region21: #{tpu_custom_call.1} parent=1 // pred_fallthru
      _
    %v45 = vld [vmem:[#allocation2] sm:$0xff]
    %v46 = vld [vmem:[#allocation2 + $0x8] sm:$0xff]
    %v47 = vld [vmem:[#allocation5] sm:$0xff]
    %v48 = vld [vmem:[#allocation5 + $0x8] sm:$0xff]
    %v49 = vsub.f32 %v45, %v47
    %v50 = vsub.f32 %v46, %v48
    %v51 = vmul.f32 %v49, %v49
    %v52 = vmul.f32 %v50, %v50
    %v53 = vld [vmem:[#allocation7] sm:$0xff]
    %v54 = vadd.f32 %v51, %v52
    %v55 = vadd.f32 %v53, %v54
    %56 = vst [vmem:[#allocation7] sm:$0xff] %v55
    // Predicated region
    $region22: #{tpu_custom_call.1} parent=1 // pred_check
      _
    $region23: #{tpu_custom_call.1} parent=1 // pred_check_branch
      %58 = sbr.rel (0) target = $region25
    $region24: #{tpu_custom_call.1} parent=1 // pred_region
      %s60 = ssub.s32 128, 128
      %61 = vsyncadd [#allocation4], %s60
      %s63 = sshll.u32 [#allocation7], 4
      %s64 = int_to_ptr.vmem [resolvable:$true] %s63
      %66 = dma.vmem_to_hbm [thread:$0]  %s64, 128, %s2, [#allocation4]
    $region25: #{tpu_custom_call.1} parent=1 // pred_fallthru
      _
    // Predicated region
    $region26: #{tpu_custom_call.1} parent=1 // pred_check
      _
    $region27: #{tpu_custom_call.1} parent=1 // pred_check_branch
      %68 = sbr.rel (0) target = $region29
    $region28: #{tpu_custom_call.1} parent=1 // pred_region
      %69 = dma.done [#allocation4], 128
    $region29: #{tpu_custom_call.1} parent=1 // pred_fallthru
      _
    %70 = vsyncpa [#allocation3], 1
    %71 = vsyncpa [#allocation6], 1
    %72 = vsyncpa [#allocation4], 1

</llo_original>
